<compile_context>
chip_gen: v5e
topology: v5e:2x2
jax: 0.10.0
libtpu: 0.0.40
codegen_flags: <defaults>
</compile_context>

<pallas_src>
import functools
import math

import jax
import jax.numpy as jnp
from jax.experimental import pallas as pl
from jax.experimental.pallas import tpu as pltpu


def _round_up(n, m):
    return ((n + m - 1) // m) * m


def _round_down(n, m):
    return (n // m) * m


def _layer_norm_kernel(alpha_ref, bias_ref, x_ref, o_ref, *, eps, inv_n, inv_nm1):
    # Single pass over the tile: sum(x) and sum(x*x) together.  Zero-padded
    # rows/columns contribute 0 to both sums and the divisors use the real D,
    # so padding does not perturb the statistics.
    x = x_ref[...].astype(jnp.float32)                       # (tm, Dp)
    s = jnp.sum(x, axis=-1, keepdims=True)                   # (tm, 1)
    sq = jnp.sum(x * x, axis=-1, keepdims=True)              # (tm, 1)
    mean = s * inv_n
    # Unbiased variance (torch.std default, divide by N-1); clamp tiny negative
    # rounding so sqrt never sees a negative.
    var = jnp.maximum(sq - s * mean, 0.0) * inv_nm1
    std = jnp.sqrt(var)
    # Exact divide, but only on the (tm, 1) column -> per-element work is mul+add.
    scale = alpha_ref[0] / (std + eps)                       # (tm, 1)
    shift = bias_ref[0] - mean * scale                       # (tm, 1)
    o_ref[...] = (x * scale + shift).astype(o_ref.dtype)


def _vmem_cap_bytes():
    """Generation-aware VMEM capacity (64 MiB v7x, 128 MiB v5e/v6e)."""
    cap = None
    try:
        info = pltpu.get_tpu_info()
        cap = getattr(info, "vmem_capacity_bytes", None)
    except Exception:
        cap = None
    if not cap:
        cap = 64 * 1024 * 1024   # conservative default that fits every generation
    return int(cap)


def layer_norm(x, alpha, bias, *, eps=1e-6, target_block_bytes=4 * 1024 * 1024):
    """LayerNormalization forward.  x: (..., D); alpha, bias: shape-(1,) params."""
    orig_shape = x.shape
    D = int(orig_shape[-1])
    M = int(math.prod(orig_shape[:-1])) if len(orig_shape) > 1 else 1
    x2 = x.reshape(M, D)

    itemsize = x2.dtype.itemsize
    sublane = max(8, 32 // itemsize)      # 8 for f32, 16 for bf16, 32 for int8/fp8

    # Lane-dense output: pad the feature dim to a multiple of 128 (masked vst
    # partial stores are ~4.5x slower).  Production D should already be 128-wide.
    D_pad = _round_up(D, 128)

    # D-adaptive row tile: target a multi-MiB input block so HBM DMAs are long
    # and the ~0.35 us per-grid-step overhead is amortized.
    row_bytes = D_pad * itemsize
    tm = max(sublane, _round_down(max(target_block_bytes // row_bytes, sublane), sublane))

    # Clamp by the VMEM budget: double-buffered in/out blocks + ~4 f32 temps.
    vmem_cap = min(100 * 1024 * 1024, (_vmem_cap_bytes() * 3) // 4)
    per_row_vmem = D_pad * (4 * itemsize + 16)
    max_tm_vmem = max(sublane,
                      _round_down(max((vmem_cap - (2 << 20)) // per_row_vmem, sublane),
                                  sublane))
    tm = min(tm, max_tm_vmem)

    # Don't blow tiny inputs up past their (aligned) row count.
    M_aligned = _round_up(M, sublane)
    tm = min(tm, M_aligned)

    # v7x megacore: keep >= 2 grid steps on the 'parallel' axis when rows allow,
    # so both TensorCores get work (harmless on 1-TC v5e/v6e).
    if M_aligned > sublane and -(-M_aligned // tm) < 2:
        tm = _round_up(-(-M_aligned // 2), sublane)

    M_pad = _round_up(M, tm)
    if (M_pad != M) or (D_pad != D):
        x2 = jnp.pad(x2, ((0, M_pad - M), (0, D_pad - D)))

    alpha = jnp.asarray(alpha, jnp.float32).reshape((1,))
    bias = jnp.asarray(bias, jnp.float32).reshape((1,))

    vmem_limit = int(max(8 << 20, min(vmem_cap, tm * per_row_vmem + (2 << 20))))

    cost = pl.CostEstimate(
        flops=5 * M_pad * D_pad,                 # x*x, 2 reduces, fused mul+add
        transcendentals=M_pad,                   # one sqrt per row
        bytes_accessed=2 * M_pad * D_pad * itemsize,
    )

    inv_n = 1.0 / float(D)
    inv_nm1 = 1.0 / float(max(D - 1, 1))         # D == 1 guard (torch would give NaN)
    kernel = functools.partial(_layer_norm_kernel, eps=float(eps),
                               inv_n=inv_n, inv_nm1=inv_nm1)

    out2 = pl.pallas_call(
        kernel,
        out_shape=jax.ShapeDtypeStruct((M_pad, D_pad), x.dtype),
        grid_spec=pltpu.PrefetchScalarGridSpec(
            num_scalar_prefetch=0,
            grid=(M_pad // tm,),
            in_specs=[
                pl.BlockSpec(memory_space=pltpu.MemorySpace.SMEM),  # alpha (scalar)
                pl.BlockSpec(memory_space=pltpu.MemorySpace.SMEM),  # bias  (scalar)
                pl.BlockSpec((tm, D_pad), lambda i: (i, 0)),        # x row tile
            ],
            out_specs=pl.BlockSpec((tm, D_pad), lambda i: (i, 0)),
        ),
        compiler_params=pltpu.CompilerParams(
            dimension_semantics=("parallel",),
            vmem_limit_bytes=vmem_limit),
        cost_estimate=cost,
    )(alpha, bias, x2)

    if (M_pad != M) or (D_pad != D):
        out2 = out2[:M, :D]
    return out2.reshape(orig_shape)


def _reference(x, alpha, bias, eps=1e-6):
    mean = jnp.mean(x, axis=-1, keepdims=True)
    std = jnp.std(x, axis=-1, keepdims=True, ddof=1)   # unbiased, like torch.std
    return alpha * (x - mean) / (std + eps) + bias


if __name__ == "__main__":
    key = jax.random.PRNGKey(0)
    k1, k2 = jax.random.split(key)

    # Shapes consistent with the module's use: (batch, seq, hidden).
    batch, seq, hidden = 2, 8, 32
    x = jax.random.normal(k1, (batch, seq, hidden), jnp.float32)
    alpha = jnp.array([1.5], jnp.float32)   # non-default to exercise the scale
    bias = jnp.array([0.25], jnp.float32)   # non-default to exercise the shift

    out = jax.block_until_ready(layer_norm(x, alpha, bias))
    assert out.shape == x.shape
    ref = _reference(x, alpha, bias)
    assert jnp.allclose(out, ref, atol=1e-5, rtol=1e-5)

    # Second check: ragged row count and D not a multiple of 128
    # (exercises the padded-row and lane-padding paths).
    x2 = jax.random.normal(k2, (3, 5, 160), jnp.float32)
    out2 = jax.block_until_ready(layer_norm(x2, alpha, bias))
    ref2 = _reference(x2, alpha, bias)
    assert out2.shape == x2.shape
    assert jnp.allclose(out2, ref2, atol=1e-5, rtol=1e-5)

    print("KERNEL_OK")
</pallas_src>

<mosaic_0001>
module attributes {stable_mosaic.version = 11 : i64} {
  func.func @_layer_norm_kernel(%arg0: i32, %arg1: memref<1xf32, #tpu.memory_space<smem>>, %arg2: memref<1xf32, #tpu.memory_space<smem>>, %arg3: memref<8x128xf32, #tpu.memory_space<vmem>>, %arg4: memref<8x128xf32, #tpu.memory_space<vmem>>) attributes {dimension_semantics = [#tpu.dimension_semantics<parallel>], iteration_bounds = array<i64: 2>, scalar_prefetch = 0 : i64, scratch_operands = 0 : i64, tpu.core_type = #tpu.core_type<tc>, window_params = [{transform_indices = @transform_0, window_bounds = array<i64: 1>}, {transform_indices = @transform_1, window_bounds = array<i64: 1>}, {transform_indices = @transform_2, window_bounds = array<i64: 8, 128>}, {transform_indices = @transform_3, window_bounds = array<i64: 8, 128>}]} {
    %c0 = arith.constant 0 : index
    %c0_0 = arith.constant 0 : index
    %0 = vector.load %arg3[%c0, %c0_0] : memref<8x128xf32, #tpu.memory_space<vmem>>, vector<8x128xf32>
    %cst = arith.constant dense<0.000000e+00> : vector<8xf32>
    %1 = vector.multi_reduction <add>, %0, %cst [1] : vector<8x128xf32> to vector<8xf32>
    %2 = vector.shape_cast %1 : vector<8xf32> to vector<8x1xf32>
    %3 = arith.mulf %0, %0 : vector<8x128xf32>
    %cst_1 = arith.constant dense<0.000000e+00> : vector<8xf32>
    %4 = vector.multi_reduction <add>, %3, %cst_1 [1] : vector<8x128xf32> to vector<8xf32>
    %5 = vector.shape_cast %4 : vector<8xf32> to vector<8x1xf32>
    %cst_2 = arith.constant 3.125000e-02 : f32
    %6 = vector.broadcast %cst_2 : f32 to vector<8x1xf32>
    %7 = arith.mulf %2, %6 : vector<8x1xf32>
    %8 = arith.mulf %2, %7 : vector<8x1xf32>
    %9 = arith.subf %5, %8 : vector<8x1xf32>
    %cst_3 = arith.constant 0.000000e+00 : f32
    %10 = vector.broadcast %cst_3 : f32 to vector<8x1xf32>
    %11 = arith.maximumf %9, %10 : vector<8x1xf32>
    %cst_4 = arith.constant 0.0322580636 : f32
    %12 = vector.broadcast %cst_4 : f32 to vector<8x1xf32>
    %13 = arith.mulf %11, %12 : vector<8x1xf32>
    %14 = math.sqrt %13 : vector<8x1xf32>
    %c0_5 = arith.constant 0 : index
    %15 = memref.load %arg1[%c0_5] : memref<1xf32, #tpu.memory_space<smem>>
    %cst_6 = arith.constant 9.99999997E-7 : f32
    %16 = vector.broadcast %cst_6 : f32 to vector<8x1xf32>
    %17 = arith.addf %14, %16 : vector<8x1xf32>
    %18 = vector.broadcast %15 : f32 to vector<8x1xf32>
    %19 = arith.divf %18, %17 : vector<8x1xf32>
    %c0_7 = arith.constant 0 : index
    %20 = memref.load %arg2[%c0_7] : memref<1xf32, #tpu.memory_space<smem>>
    %21 = arith.mulf %7, %19 : vector<8x1xf32>
    %22 = vector.broadcast %20 : f32 to vector<8x1xf32>
    %23 = arith.subf %22, %21 : vector<8x1xf32>
    %24 = vector.broadcast %19 : vector<8x1xf32> to vector<8x128xf32>
    %25 = arith.mulf %0, %24 : vector<8x128xf32>
    %26 = vector.broadcast %23 : vector<8x1xf32> to vector<8x128xf32>
    %27 = arith.addf %25, %26 : vector<8x128xf32>
    %c0_8 = arith.constant 0 : index
    %c0_9 = arith.constant 0 : index
    %28 = vector.load %arg4[%c0_8, %c0_9] : memref<8x128xf32, #tpu.memory_space<vmem>>, vector<8x128xf32>
    tpu.vector_store %arg4[%c0_8, %c0_9], %27 {strides = array<i32>} : memref<8x128xf32, #tpu.memory_space<vmem>>, vector<8x128xf32>,
    return
  }
  func.func @transform_0(%arg0: i32) -> i32 {
    %c0_i32 = arith.constant 0 : i32
    %c0_i32_0 = arith.constant 0 : i32
    return %c0_i32 : i32
  }
  func.func @transform_1(%arg0: i32) -> i32 {
    %c0_i32 = arith.constant 0 : i32
    %c0_i32_0 = arith.constant 0 : i32
    return %c0_i32 : i32
  }
  func.func @transform_2(%arg0: i32) -> (i32, i32) {
    %c0_i32 = arith.constant 0 : i32
    %c0_i32_0 = arith.constant 0 : i32
    return %arg0, %c0_i32 : i32, i32
  }
  func.func @transform_3(%arg0: i32) -> (i32, i32) {
    %c0_i32 = arith.constant 0 : i32
    %c0_i32_0 = arith.constant 0 : i32
    return %arg0, %c0_i32 : i32, i32
  }
}

</mosaic_0001>

<llo_original>
// kernel: tpu_custom_call.1
$region0: #{tpu_custom_call.1}
  #allocation0 [shape = 'u32[]', space=smem, size = 0x4, offset = 0x4, fixed_abs, tag = 'smem constant byte address 0x4 - core index']
  #allocation1 [shape = 'u32[72,128]{1,0:T(1,128)}', space=vmem, size = 0x9000, scoped, tag = 'internal scratch']
  #allocation2 [shape = 'f32[1]{0:T(128)S(6)}', space=smem, size = 0x200, scoped, tag = 'scoped memory for tpu_custom_call.1']
  #allocation3 [shape = 'f32[1]{0:T(128)S(6)}', space=smem, size = 0x200, scoped, tag = 'scoped memory for tpu_custom_call.1']
  %s0 = inlined_call_operand.<no memory space> [shape: f32[1], index: 0, kind: input, shape index: {}]
  %s1 = inlined_call_operand.<no memory space> [shape: f32[1], index: 1, kind: input, shape index: {}]
  %s2 = inlined_call_operand.hbm [shape: f32[16,128], index: 2, kind: input, shape index: {}]
  %s3 = inlined_call_operand.hbm [shape: f32[16,128], index: 3, kind: output, shape index: {}]
  %s4 = sld [smem:[#allocation0]]
  $region49: #{tpu_custom_call.1} parent=0
    _
  %s6 = ssub.s32 1, %s4
  %s7 = scalar_select 0, %s6, %s4
  %8 = sst [smem:[#allocation2]] %s0
  %9 = sst [smem:[#allocation3]] %s1
  $region1: #{tpu_custom_call.1} parent=0
    #allocation4 [shape = 'u8[8192]{0}', space=vmem, size = 0x2000, scoped, tag = 'input window, operand 2']
    #allocation5 [shape = 's32[2]{0}', space=sflag, size = 0x8, scoped, tag = 'scoped memory for tpu_custom_call.1']
    #allocation6 [shape = 's32[2]{0}', space=sflag, size = 0x8, scoped, tag = 'scoped memory for tpu_custom_call.1']
    #allocation7 [shape = 'u8[8192]{0}', space=vmem, size = 0x2000, scoped, tag = 'output window, operand 0']
    %10 = vsyncpa [#allocation5], 0
    %s11 = scalar_lea.sflag [#allocation5], 1
    %12 = vsyncpa %s11, 0
    %13 = vsyncpa [#allocation6], 0
    %s14 = scalar_lea.sflag [#allocation6], 1
    %15 = vsyncpa %s14, 0
    loop: start=0, step=1, limit=4
    $region2: #{tpu_custom_call.1} parent=1 // loop_pre_header
      _
    $region3: #{tpu_custom_call.1} parent=1 // loop_header
      %s17 = sphi 0, %s21
      %p18 = scmp.ge.s32.totalorder %s17, 4
      %s25 = sphi 0, %s25
      %s27 = sphi 0, %s25
      %s28 = sphi 0, %s27
      %s42 = sphi 0, %s28
      %s46 = sphi 0, %s46
      %s48 = sphi 0, %s46
      %s49 = sphi 0, %s48
      %s63 = sphi 0, %s49
      %s69 = sphi 0, %s71
      %s72 = sphi 0, %s69
      %s73 = sphi 0, %s72
      %s89 = sphi 0, %s73
      %s95 = sphi 0, %s97
      %s98 = sphi 0, %s95
      %s99 = sphi 0, %s98
      %s115 = sphi 0, %s99
    $region4: #{tpu_custom_call.1} parent=1 // loop_header_branch
      %20 = sbr.rel (%p18) target = $region8
    $region5: #{tpu_custom_call.1} parent=1 // loop_body
      %s22 = ssub.s32 %s17, 1
      %s23 = ssub.s32 %s17, 2
      %s24 = sadd.s32 %s17, 1
      %s26 = sadd.s32 %s25, 1
      %p29 = scmp.eq.s32.totalorder %s17, 1
      %p30 = scmp.ne.s32.totalorder %s25, %s27
      %p31 = scmp.eq.s32.totalorder %s17, 0
      %p32 = por %p30, %p31
      %p33 = scmp.ne.s32.totalorder %s25, %s27
      %p34 = scmp.eq.s32.totalorder %s22, 1
      %p35 = por %p33, %p34
      %p36 = scmp.ne.s32.totalorder %s27, %s28
      %p37 = scmp.eq.s32.totalorder %s22, 0
      %p38 = por %p36, %p37
      %p39 = scmp.ne.s32.totalorder %s27, %s28
      %p40 = scmp.eq.s32.totalorder %s23, 1
      %p41 = por %p39, %p40
      %p43 = scmp.ne.s32.totalorder %s28, %s42
      %p44 = scmp.eq.s32.totalorder %s23, 0
      %p45 = por %p43, %p44
      %s47 = sadd.s32 %s46, 1
      %p50 = scmp.eq.s32.totalorder %s17, 1
      %p51 = scmp.ne.s32.totalorder %s46, %s48
      %p52 = scmp.eq.s32.totalorder %s17, 0
      %p53 = por %p51, %p52
      %p54 = scmp.ne.s32.totalorder %s46, %s48
      %p55 = scmp.eq.s32.totalorder %s22, 1
      %p56 = por %p54, %p55
      %p57 = scmp.ne.s32.totalorder %s48, %s49
      %p58 = scmp.eq.s32.totalorder %s22, 0
      %p59 = por %p57, %p58
      %p60 = scmp.ne.s32.totalorder %s48, %s49
      %p61 = scmp.eq.s32.totalorder %s23, 1
      %p62 = por %p60, %p61
      %p64 = scmp.ne.s32.totalorder %s49, %s63
      %p65 = scmp.eq.s32.totalorder %s23, 0
      %p66 = por %p64, %p65
      %s67 = ssub.s32 %s17, %s24
      %p68 = scmp.eq.s32.totalorder %s67, 0
      %s70 = sadd.s32 %s69, 1
      %s71 = scalar_select %p68, %s69, %s70
      %p74 = pneg %p68
      %p75 = scmp.eq.s32.totalorder %s17, 1
      %p76 = por %p74, %p75
      %p77 = scmp.ne.s32.totalorder %s69, %s72
      %p78 = scmp.eq.s32.totalorder %s17, 0
      %p79 = por %p77, %p78
      %p80 = scmp.ne.s32.totalorder %s69, %s72
      %p81 = scmp.eq.s32.totalorder %s22, 1
      %p82 = por %p80, %p81
      %p83 = scmp.ne.s32.totalorder %s72, %s73
      %p84 = scmp.eq.s32.totalorder %s22, 0
      %p85 = por %p83, %p84
      %p86 = scmp.ne.s32.totalorder %s72, %s73
      %p87 = scmp.eq.s32.totalorder %s23, 1
      %p88 = por %p86, %p87
      %p90 = scmp.ne.s32.totalorder %s73, %s89
      %p91 = scmp.eq.s32.totalorder %s23, 0
      %p92 = por %p90, %p91
      %s93 = ssub.s32 %s17, %s24
      %p94 = scmp.eq.s32.totalorder %s93, 0
      %s96 = sadd.s32 %s95, 1
      %s97 = scalar_select %p94, %s95, %s96
      %p100 = pneg %p94
      %p101 = scmp.eq.s32.totalorder %s17, 1
      %p102 = por %p100, %p101
      %p103 = scmp.ne.s32.totalorder %s95, %s98
      %p104 = scmp.eq.s32.totalorder %s17, 0
      %p105 = por %p103, %p104
      %p106 = scmp.ne.s32.totalorder %s95, %s98
      %p107 = scmp.eq.s32.totalorder %s22, 1
      %p108 = por %p106, %p107
      %p109 = scmp.ne.s32.totalorder %s98, %s99
      %p110 = scmp.eq.s32.totalorder %s22, 0
      %p111 = por %p109, %p110
      %p112 = scmp.ne.s32.totalorder %s98, %s99
      %p113 = scmp.eq.s32.totalorder %s23, 1
      %p114 = por %p112, %p113
      %p116 = scmp.ne.s32.totalorder %s99, %s115
      %p117 = scmp.eq.s32.totalorder %s23, 0
      %p118 = por %p116, %p117
      %p119 = scmp.le.s32.totalorder 1, %s17
      %p120 = scmp.lt.s32.totalorder %s17, 3
      %p121 = pnand %p119, %p120
      %p122 = pneg %p121
      // Predicated region
      $region9: #{tpu_custom_call.1} parent=5 // pred_check
        _
      $region10: #{tpu_custom_call.1} parent=5 // pred_check_branch
        %124 = sbr.rel (%p121) target = $region12
      $region11: #{tpu_custom_call.1} parent=5 // pred_region
        %s125 = ssub.s32 %s17, 1
        // Predicated region
        $region13: #{tpu_custom_call.1} parent=11 // pred_check
          %p126 = pneg %p38
        $region14: #{tpu_custom_call.1} parent=11 // pred_check_branch
          %128 = sbr.rel (%p126) target = $region16
        $region15: #{tpu_custom_call.1} parent=11 // pred_region
          _
        $region16: #{tpu_custom_call.1} parent=11 // pred_fallthru
          _
        // Predicated region
        $region17: #{tpu_custom_call.1} parent=11 // pred_check
          %p129 = pneg %p59
        $region18: #{tpu_custom_call.1} parent=11 // pred_check_branch
          %131 = sbr.rel (%p129) target = $region20
        $region19: #{tpu_custom_call.1} parent=11 // pred_region
          _
        $region20: #{tpu_custom_call.1} parent=11 // pred_fallthru
          _
      $region12: #{tpu_custom_call.1} parent=5 // pred_fallthru
        _
      %p132 = scmp.lt.s32.totalorder %s17, 2
      // Predicated region
      $region21: #{tpu_custom_call.1} parent=5 // pred_check
        %p133 = pneg %p132
      $region22: #{tpu_custom_call.1} parent=5 // pred_check_branch
        %135 = sbr.rel (%p133) target = $region24
      $region23: #{tpu_custom_call.1} parent=5 // pred_region
        // Predicated region
        $region25: #{tpu_custom_call.1} parent=23 // pred_check
          %p136 = pneg %p79
        $region26: #{tpu_custom_call.1} parent=23 // pred_check_branch
          %138 = sbr.rel (%p136) target = $region28
        $region27: #{tpu_custom_call.1} parent=23 // pred_region
          %s139 = sand.u32 %s69, 1
          %s140 = scalar_lea.sflag [#allocation5], %s139
          %s141 = sand.u32 %s69, 1
          %s142 = smul.addr %s141, 8
          %s143 = scalar_lea.vmem [#allocation4], %s142
          %145 = vsyncadd %s140, 0
          %s146 = smul.addr %s17, 8
          %s147 = scalar_lea.hbm %s2, %s146
          %s149 = sshll.u32 %s147, 4
          %s150 = int_to_ptr.hbm [resolvable:$true] %s149
          %s151 = sshll.u32 %s143, 4
          %s152 = int_to_ptr.vmem [resolvable:$true] %s151
          %154 = dma.hbm_to_vmem [thread:$0]  %s150, 128, %s152, %s140
        $region28: #{tpu_custom_call.1} parent=23 // pred_fallthru
          _
      $region24: #{tpu_custom_call.1} parent=5 // pred_fallthru
        _
      %p155 = scmp.le.s32.totalorder 1, %s17
      %p156 = scmp.lt.s32.totalorder %s17, 3
      %p157 = pnand %p155, %p156
      %p158 = pneg %p157
      // Predicated region
      $region29: #{tpu_custom_call.1} parent=5 // pred_check
        _
      $region30: #{tpu_custom_call.1} parent=5 // pred_check_branch
        %160 = sbr.rel (%p157) target = $region32
      $region31: #{tpu_custom_call.1} parent=5 // pred_region
        %s161 = ssub.s32 %s17, 1
        %s162 = sand.u32 %s72, 1
        %s163 = scalar_lea.sflag [#allocation5], %s162
        %s164 = sand.u32 %s72, 1
        %s165 = smul.addr %s164, 8
        %s166 = scalar_lea.vmem [#allocation4], %s165
        // Predicated region
        $region33: #{tpu_custom_call.1} parent=31 // pred_check
          %p167 = pneg %p85
        $region34: #{tpu_custom_call.1} parent=31 // pred_check_branch
          %169 = sbr.rel (%p167) target = $region36
        $region35: #{tpu_custom_call.1} parent=31 // pred_region
          %171 = dma.done %s163, 128
        $region36: #{tpu_custom_call.1} parent=31 // pred_fallthru
          _
        %p172 = pneg %p38
        %p173 = pneg %p35
        %p174 = pneg %p59
        %p175 = pneg %p56
        %s176 = sand.u32 %s72, 1
        %s177 = scalar_lea.sflag [#allocation5], %s176
        %s178 = sand.u32 %s72, 1
        %s179 = smul.addr %s178, 8
        %s180 = scalar_lea.vmem [#allocation4], %s179
        %p181 = pneg %p85
        %p182 = pneg %p82
        %p183 = pneg %p111
        %p184 = pneg %p108
        %s185 = sand.u32 %s98, 1
        %s186 = scalar_lea.sflag [#allocation6], %s185
        %s187 = sand.u32 %s98, 1
        %s188 = smul.addr %s187, 8
        %s189 = scalar_lea.vmem [#allocation7], %s188
        %v190 = vld [vmem:[%s166] sm:$0xff]
        %191 = vadd.xlane.f32.xlu0 %v190
        %v192 = vpop.xlane.xlu0 %191
        %v193 = vmul.f32 %v190, %v190
        %194 = vadd.xlane.f32.xlu0 %v193
        %v195 = vpop.xlane.xlu0 %194
        %v196 = vmul.f32 %v192, 0.03125
        %v197 = vmul.f32 %v192, %v196
        %v198 = vsub.f32 %v195, %v197
        %v199 = vmax.f32 %v198, 0.0
        %v200 = vmul.f32 %v199, 0.032258064
        %v201 = vrsqrt.pop %v200
        %v202 = vmul.f32 %v201, %v200
        %v203 = vmul.f32 %v202, %v201
        %v204 = vmul.f32 0.5, %v203
        %v205 = vsub.f32 1.5, %v204
        %v206 = vmul.f32 %v201, %v205
        %v207 = vmul.f32 %v200, %v206
        %vm208 = vcmp.eq.f32.partialorder %v200, inf
        %v209 = vsel %vm208, %v200, %v207
        %vm210 = vcmp.eq.f32.partialorder %v200, 0.0
        %v211 = vand.u32 %v200, 2147483648
        %v212 = vsel %vm210, %v211, %v209
        %s213 = sld [smem:[#allocation2]]
        %v214 = vadd.f32 %v212, 1e-06
        %v215 = vstv %s213
        %v216 = vrcp.pop %v214
        %v217 = vmul.f32 %v214, %v216
        %v218 = vsub.f32 1.0, %v217
        %v219 = vmul.f32 %v216, %v218
        %v220 = vadd.f32 %v216, %v219
        %vm221 = vweird.f32 %v214
        %vm222 = vweird.f32 %v216
        %vm223 = vmor %vm221, %vm222
        %v224 = vsel %vm223, %v216, %v220
        %v225 = vand.u32 2147483647, %v214
        %vm226 = vcmp.eq.f32.partialorder %v225, 8.507059e+37
        %v227 = vand.u32 %v214, 2147483648
        %v228 = vor.u32 1.1754944e-38, %v227
        %v229 = vsel %vm226, %v228, %v224
        %v230 = vmul.f32 %v215, %v229
        %s231 = sld [smem:[#allocation3]]
        %v232 = vmul.f32 %v196, %v230
        %v233 = vstv %s231
        %v234 = vsub.f32 %v233, %v232
        %v235 = vmul.f32 %v190, %v230
        %v236 = vadd.f32 %v235, %v234
        %237 = vst [vmem:[%s189] sm:$0xff] %v236
        %s238 = sand.u32 %s98, 1
        %s239 = scalar_lea.sflag [#allocation6], %s238
        %s240 = sand.u32 %s98, 1
        %s241 = smul.addr %s240, 8
        %s242 = scalar_lea.vmem [#allocation7], %s241
        // Predicated region
        $region37: #{tpu_custom_call.1} parent=31 // pred_check
          %p243 = pneg %p108
        $region38: #{tpu_custom_call.1} parent=31 // pred_check_branch
          %245 = sbr.rel (%p243) target = $region40
        $region39: #{tpu_custom_call.1} parent=31 // pred_region
          %247 = vsyncadd %s239, 0
          %s248 = smul.addr %s22, 8
          %s249 = scalar_lea.hbm %s3, %s248
          %s251 = sshll.u32 %s242, 4
          %s252 = int_to_ptr.vmem [resolvable:$true] %s251
          %s253 = sshll.u32 %s249, 4
          %s254 = int_to_ptr.hbm [resolvable:$true] %s253
          %256 = dma.vmem_to_hbm [thread:$0]  %s252, 128, %s254, %s239
        $region40: #{tpu_custom_call.1} parent=31 // pred_fallthru
          _
      $region32: #{tpu_custom_call.1} parent=5 // pred_fallthru
        _
      %p257 = scmp.le.s32.totalorder 2, %s17
      // Predicated region
      $region41: #{tpu_custom_call.1} parent=5 // pred_check
        %p258 = pneg %p257
      $region42: #{tpu_custom_call.1} parent=5 // pred_check_branch
        %260 = sbr.rel (%p258) target = $region44
      $region43: #{tpu_custom_call.1} parent=5 // pred_region
        %s261 = ssub.s32 %s17, 2
        // Predicated region
        $region45: #{tpu_custom_call.1} parent=43 // pred_check
          %p262 = pneg %p114
        $region46: #{tpu_custom_call.1} parent=43 // pred_check_branch
          %264 = sbr.rel (%p262) target = $region48
        $region47: #{tpu_custom_call.1} parent=43 // pred_region
          %s265 = sand.u32 %s99, 1
          %s266 = scalar_lea.sflag [#allocation6], %s265
          %s267 = sand.u32 %s99, 1
          %s268 = smul.addr %s267, 8
          %s269 = scalar_lea.vmem [#allocation7], %s268
          %271 = dma.done %s266, 128
        $region48: #{tpu_custom_call.1} parent=43 // pred_fallthru
          _
      $region44: #{tpu_custom_call.1} parent=5 // pred_fallthru
        _
    $region6: #{tpu_custom_call.1} parent=1 // loop_footer
      %s21 = sadd.s32 1, %s17
    $region7: #{tpu_custom_call.1} parent=1 // loop_footer_branch
      %16 = sbr.rel target = $region3
    $region8: #{tpu_custom_call.1} parent=1 // loop_exit
      _
    %272 = vsyncpa [#allocation5], 1
    %s273 = scalar_lea.sflag [#allocation5], 1
    %274 = vsyncpa %s273, 1
    %275 = vsyncpa [#allocation6], 1
    %s276 = scalar_lea.sflag [#allocation6], 1
    %277 = vsyncpa %s276, 1

</llo_original>
